<compile_context>
chip_gen: v7x
topology: tpu7x:2x2x1
jax: 0.10.0
libtpu: 0.0.40
codegen_flags: <defaults>
</compile_context>

<pallas_src>
import functools

import jax
import jax.numpy as jnp
from jax.experimental import pallas as pl
from jax.experimental.pallas import tpu as pltpu


def _layernorm_kernel(x_ref, gamma_ref, beta_ref, o_ref, *, eps, hidden,
                      padded_hidden):
    # x_ref: (tile_rows, Hp)  gamma_ref/beta_ref: (1, Hp) f32  o_ref: (tile_rows, Hp)
    x = x_ref[...].astype(jnp.float32)
    inv_h = jnp.float32(1.0 / hidden)

    # Mean: padded lanes are zero in the wrapper, so the plain lane-sum is
    # already the sum over the true `hidden` lanes.
    mean = jnp.sum(x, axis=-1, keepdims=True) * inv_h

    # Two-pass variance (matches torch.var(unbiased=False) numerics).
    if padded_hidden != hidden:
        lane = jax.lax.broadcasted_iota(jnp.int32, x.shape, dimension=1)
        diff = jnp.where(lane < hidden, x - mean, 0.0)
    else:
        diff = x - mean
    var = jnp.sum(diff * diff, axis=-1, keepdims=True) * inv_h

    inv_std = jax.lax.rsqrt(var + eps)          # EUP; free under HBM bound
    g = gamma_ref[...]                          # already f32 (cast hoisted)
    b = beta_ref[...]
    # TODO(synk): optional bf16 affine (g/b in bf16) on v6e/v7x to shrink f32
    # temporaries further; kept f32 everywhere for exact parity with the ref.
    o_ref[...] = (diff * inv_std * g + b).astype(o_ref.dtype)


def _device_kind():
    try:
        return jax.devices()[0].device_kind.lower()
    except Exception:
        return ""


def _vmem_budget_bytes():
    """Conservative VMEM budget for the pipelined blocks (generation aware)."""
    cap = None
    try:
        info = pltpu.get_tpu_info()
        cap = int(getattr(info, "vmem_capacity_bytes", 0)) or None
    except Exception:
        cap = None
    if cap is None:
        # Only v7x has the small 64 MiB per-TC VMEM; v5e/v6e have 128 MiB,
        # so do not shrink their budget when the query fails.
        cap = 64 * 1024 * 1024 if "v7" in _device_kind() else 128 * 1024 * 1024
    budget = min(cap // 2, 48 * 1024 * 1024)      # blocks + f32 temporaries
    limit = min((cap * 3) // 4, 96 * 1024 * 1024)  # scoped-VMEM limit we request
    return budget, limit


def _num_tensorcores():
    """Best-effort TensorCore count per device (for grid splitting)."""
    try:
        info = pltpu.get_tpu_info()
        for attr in ("num_cores", "core_count", "num_tensorcores"):
            n = getattr(info, attr, None)
            if isinstance(n, int) and n > 0:
                return n
    except Exception:
        pass
    kind = _device_kind()
    if not kind:
        return 2  # unknown: splitting into 2 blocks is ~free on 1-TC chips
    if "v7" in kind or "v4" in kind:
        return 2
    return 1


def _round_up(v, m):
    return ((v + m - 1) // m) * m


def _pick_tile_rows(R, H, dtype, budget_bytes, min_blocks):
    itemsize = jnp.dtype(dtype).itemsize
    # Sublane packing: 8 rows per vreg for 4-byte, 16 for 2-byte, 32 for 1-byte.
    sublane = {4: 8, 2: 16, 1: 32}.get(itemsize, 8)

    # Per-row VMEM cost across the pipeline:
    #   2x double-buffered (input + output) blocks at native dtype
    #   + ~3 full-tile f32 temporaries (upcast, diff, normalize chain).
    bytes_per_row = H * (4 * itemsize + 3 * 4)
    vmem_rows = max(budget_bytes // max(bytes_per_row, 1), sublane)

    # HBM-roofline byte target per input block (~4 MiB DMAs), not a row cap.
    target_rows = max((4 * 1024 * 1024) // max(H * itemsize, 1), sublane)

    tile = max((min(vmem_rows, target_rows) // sublane) * sublane, sublane)

    if R <= tile:
        # Whole input fits in one block: still split into `min_blocks`
        # near-equal sublane-aligned blocks so multi-TC chips (v7x) get work.
        if min_blocks > 1 and R > sublane:
            split = _round_up(pl.cdiv(R, min_blocks), sublane)
            if split < R:
                return split
        return R  # full-extent block is always legal

    # Balance blocks: avoid a nearly-empty ragged last block.
    n_blocks = max(pl.cdiv(R, tile), min_blocks)
    tile = _round_up(pl.cdiv(R, n_blocks), sublane)
    return max(tile, sublane)


def _layernorm_xla(x, gamma, beta, eps):
    # Lane-narrow fallback; stats in f32 so numerics match the Pallas path.
    xf = x.astype(jnp.float32)
    mean = jnp.mean(xf, axis=-1, keepdims=True)
    var = jnp.mean((xf - mean) ** 2, axis=-1, keepdims=True)
    y = (xf - mean) * jax.lax.rsqrt(var + eps)
    y = y * gamma.astype(jnp.float32) + beta.astype(jnp.float32)
    return y.astype(x.dtype)


def layer_normalization(x, gamma, beta, *, eps=1e-6, tile_rows=None,
                        donate_x=False):
    """LayerNorm over the last dim of x. x: (..., H); gamma/beta: (H,)."""
    orig_shape = x.shape
    H = orig_shape[-1]

    if H < 128:
        # Lane-narrow: a row-tiled Pallas kernel would use <25% of each vreg
        # and emit masked partial stores; plain XLA is the better layout here.
        # TODO(synk): lane-packed variant (reshape to (R*H/128, 128) +
        # segmented reduction) for H < 128 if a fused Pallas path is needed.
        return _layernorm_xla(x, gamma, beta, eps)

    x2d = x.reshape(-1, H)
    R = x2d.shape[0]

    # Lane-dense output stores: pad H up to a multiple of 128 in the wrapper
    # (stats are masked / divided by the true H inside the kernel).
    Hp = _round_up(H, 128)
    padded = Hp != H
    if padded:
        x2d = jnp.pad(x2d, ((0, 0), (0, Hp - H)))

    gamma2d = gamma.reshape(1, H).astype(jnp.float32)
    beta2d = beta.reshape(1, H).astype(jnp.float32)
    if padded:
        gamma2d = jnp.pad(gamma2d, ((0, 0), (0, Hp - H)))
        beta2d = jnp.pad(beta2d, ((0, 0), (0, Hp - H)))

    budget, vmem_limit = _vmem_budget_bytes()
    min_blocks = _num_tensorcores()
    if tile_rows is None:
        tile_rows = _pick_tile_rows(R, Hp, x.dtype, budget, min_blocks)
    else:
        tile_rows = min(tile_rows, R)

    grid = (pl.cdiv(R, tile_rows),)

    # Caller-opt-in activation-buffer donation (x2d and out share shape/dtype).
    aliases = {0: 0} if (donate_x and not padded) else {}

    out = pl.pallas_call(
        functools.partial(_layernorm_kernel, eps=eps, hidden=H,
                          padded_hidden=Hp),
        out_shape=jax.ShapeDtypeStruct((R, Hp), x.dtype),
        grid_spec=pltpu.PrefetchScalarGridSpec(
            num_scalar_prefetch=0,
            grid=grid,
            in_specs=[
                pl.BlockSpec((tile_rows, Hp), lambda i: (i, 0)),
                pl.BlockSpec((1, Hp), lambda i: (0, 0)),
                pl.BlockSpec((1, Hp), lambda i: (0, 0)),
            ],
            out_specs=pl.BlockSpec((tile_rows, Hp), lambda i: (i, 0)),
        ),
        compiler_params=pltpu.CompilerParams(
            dimension_semantics=("parallel",),   # rows shard across TCs (v7x)
            vmem_limit_bytes=int(vmem_limit),
        ),
        input_output_aliases=aliases,
    )(x2d, gamma2d, beta2d)

    if padded:
        out = out[:, :H]
    return out.reshape(orig_shape)


if __name__ == "__main__":
    # Module: LayerNormalization(embedding_size=256, eps=1e-6)
    batch, seq, hidden = 2, 64, 256
    key = jax.random.PRNGKey(0)
    x = jax.random.normal(key, (batch, seq, hidden), dtype=jnp.float32)

    # Deterministic parameter init (matches nn.Parameter defaults in __init__).
    gamma = jnp.ones((hidden,), dtype=jnp.float32)
    beta = jnp.zeros((hidden,), dtype=jnp.float32)

    y = layer_normalization(x, gamma, beta, eps=1e-6)
    y = jax.block_until_ready(y)

    # Pure-JAX reference check (same math as the PyTorch forward).
    mean = jnp.mean(x, axis=-1, keepdims=True)
    var = jnp.mean((x - mean) ** 2, axis=-1, keepdims=True)
    ref = (x - mean) / jnp.sqrt(var + 1e-6) * gamma + beta
    assert jnp.allclose(y, ref, atol=1e-5, rtol=1e-5), "mismatch vs reference"

    print("KERNEL_OK")
</pallas_src>

<mosaic_0001>
module attributes {stable_mosaic.version = 11 : i64} {
  func.func @_layernorm_kernel(%arg0: i32, %arg1: memref<128x256xf32, #tpu.memory_space<vmem>>, %arg2: memref<1x256xf32, #tpu.memory_space<vmem>>, %arg3: memref<1x256xf32, #tpu.memory_space<vmem>>, %arg4: memref<128x256xf32, #tpu.memory_space<vmem>>) attributes {dimension_semantics = [#tpu.dimension_semantics<parallel>], iteration_bounds = array<i64: 1>, scalar_prefetch = 0 : i64, scratch_operands = 0 : i64, tpu.core_type = #tpu.core_type<tc>, window_params = [{transform_indices = @transform_0, window_bounds = array<i64: 128, 256>}, {pipeline_mode = #tpu.pipeline_mode<synchronous>, transform_indices = @transform_1, window_bounds = array<i64: 1, 256>}, {pipeline_mode = #tpu.pipeline_mode<synchronous>, transform_indices = @transform_2, window_bounds = array<i64: 1, 256>}, {transform_indices = @transform_3, window_bounds = array<i64: 128, 256>}]} {
    %c0 = arith.constant 0 : index
    %c0_0 = arith.constant 0 : index
    %0 = vector.load %arg1[%c0, %c0_0] : memref<128x256xf32, #tpu.memory_space<vmem>>, vector<128x256xf32>
    %cst = arith.constant dense<0.000000e+00> : vector<128xf32>
    %1 = vector.multi_reduction <add>, %0, %cst [1] : vector<128x256xf32> to vector<128xf32>
    %2 = vector.shape_cast %1 : vector<128xf32> to vector<128x1xf32>
    %cst_1 = arith.constant 3.906250e-03 : f32
    %3 = vector.broadcast %cst_1 : f32 to vector<128x1xf32>
    %4 = arith.mulf %2, %3 : vector<128x1xf32>
    %5 = vector.broadcast %4 : vector<128x1xf32> to vector<128x256xf32>
    %6 = arith.subf %0, %5 : vector<128x256xf32>
    %7 = arith.mulf %6, %6 : vector<128x256xf32>
    %cst_2 = arith.constant dense<0.000000e+00> : vector<128xf32>
    %8 = vector.multi_reduction <add>, %7, %cst_2 [1] : vector<128x256xf32> to vector<128xf32>
    %9 = vector.shape_cast %8 : vector<128xf32> to vector<128x1xf32>
    %cst_3 = arith.constant 3.906250e-03 : f32
    %10 = vector.broadcast %cst_3 : f32 to vector<128x1xf32>
    %11 = arith.mulf %9, %10 : vector<128x1xf32>
    %cst_4 = arith.constant 9.99999997E-7 : f32
    %12 = vector.broadcast %cst_4 : f32 to vector<128x1xf32>
    %13 = arith.addf %11, %12 : vector<128x1xf32>
    %14 = math.rsqrt %13 : vector<128x1xf32>
    %c0_5 = arith.constant 0 : index
    %c0_6 = arith.constant 0 : index
    %15 = vector.load %arg2[%c0_5, %c0_6] : memref<1x256xf32, #tpu.memory_space<vmem>>, vector<1x256xf32>
    %c0_7 = arith.constant 0 : index
    %c0_8 = arith.constant 0 : index
    %16 = vector.load %arg3[%c0_7, %c0_8] : memref<1x256xf32, #tpu.memory_space<vmem>>, vector<1x256xf32>
    %17 = vector.broadcast %14 : vector<128x1xf32> to vector<128x256xf32>
    %18 = arith.mulf %6, %17 : vector<128x256xf32>
    %19 = vector.broadcast %15 : vector<1x256xf32> to vector<128x256xf32>
    %20 = arith.mulf %18, %19 : vector<128x256xf32>
    %21 = vector.broadcast %16 : vector<1x256xf32> to vector<128x256xf32>
    %22 = arith.addf %20, %21 : vector<128x256xf32>
    %c0_9 = arith.constant 0 : index
    %c0_10 = arith.constant 0 : index
    %23 = vector.load %arg4[%c0_9, %c0_10] : memref<128x256xf32, #tpu.memory_space<vmem>>, vector<128x256xf32>
    tpu.vector_store %arg4[%c0_9, %c0_10], %22 {strides = array<i32>} : memref<128x256xf32, #tpu.memory_space<vmem>>, vector<128x256xf32>,
    return
  }
  func.func @transform_0(%arg0: i32) -> (i32, i32) {
    %c0_i32 = arith.constant 0 : i32
    %c0_i32_0 = arith.constant 0 : i32
    return %arg0, %c0_i32 : i32, i32
  }
  func.func @transform_1(%arg0: i32) -> (i32, i32) {
    %c0_i32 = arith.constant 0 : i32
    %c0_i32_0 = arith.constant 0 : i32
    %c0_i32_1 = arith.constant 0 : i32
    return %c0_i32, %c0_i32_0 : i32, i32
  }
  func.func @transform_2(%arg0: i32) -> (i32, i32) {
    %c0_i32 = arith.constant 0 : i32
    %c0_i32_0 = arith.constant 0 : i32
    %c0_i32_1 = arith.constant 0 : i32
    return %c0_i32, %c0_i32_0 : i32, i32
  }
  func.func @transform_3(%arg0: i32) -> (i32, i32) {
    %c0_i32 = arith.constant 0 : i32
    %c0_i32_0 = arith.constant 0 : i32
    return %arg0, %c0_i32 : i32, i32
  }
}

</mosaic_0001>

<llo_original>
// kernel: tpu_custom_call.1
$region0: #{tpu_custom_call.1}
  #allocation0 [shape = 'u32[]', space=smem, size = 0x4, offset = 0x4, fixed_abs, tag = 'smem constant byte address 0x4 - core index']
  #allocation1 [shape = 'u32[144,128]{1,0:T(1,128)}', space=vmem, size = 0x12000, scoped, tag = 'internal scratch']
  %s0 = inlined_call_operand.hbm [shape: f32[128,256], index: 0, kind: input, shape index: {}]
  %s1 = inlined_call_operand.hbm [shape: f32[1,256], index: 1, kind: input, shape index: {}]
  %s2 = inlined_call_operand.hbm [shape: f32[1,256], index: 2, kind: input, shape index: {}]
  %s3 = inlined_call_operand.hbm [shape: f32[128,256], index: 3, kind: output, shape index: {}]
  %s4 = sld [smem:[#allocation0]]
  $region34: #{tpu_custom_call.1} parent=0
    _
  %s6 = ssub.s32 1, %s4
  %s7 = scalar_select 0, %s6, %s4
  $region1: #{tpu_custom_call.1} parent=0
    #allocation2 [shape = 'u8[131072]{0}', space=vmem, size = 0x20000, scoped, tag = 'input window, operand 0, single buffered']
    #allocation3 [shape = 's32[1]{0}', space=sflag, size = 0x4, scoped, tag = 'scoped memory for tpu_custom_call.1']
    #allocation4 [shape = 's32[1]{0}', space=sflag, size = 0x4, scoped, tag = 'scoped memory for tpu_custom_call.1']
    #allocation5 [shape = 'u8[1024]{0}', space=vmem, size = 0x400, scoped, tag = 'input window, operand 1, single buffered']
    #allocation6 [shape = 's32[1]{0}', space=sflag, size = 0x4, scoped, tag = 'scoped memory for tpu_custom_call.1']
    #allocation7 [shape = 'u8[1024]{0}', space=vmem, size = 0x400, scoped, tag = 'input window, operand 2, single buffered']
    #allocation8 [shape = 'u8[131072]{0}', space=vmem, size = 0x20000, scoped, tag = 'output window, operand 0, single buffered']
    %8 = vsyncpa [#allocation3], 0
    %9 = vsyncpa [#allocation6], 0
    %10 = vsyncpa [#allocation4], 0
    // Predicated region
    $region2: #{tpu_custom_call.1} parent=1 // pred_check
      _
    $region3: #{tpu_custom_call.1} parent=1 // pred_check_branch
      %12 = sbr.rel (0) target = $region5
    $region4: #{tpu_custom_call.1} parent=1 // pred_region
      %s14 = ssub.s32 4096, 4096
      %15 = vsyncadd [#allocation3], %s14
      %s16 = sshll.u32 [#allocation2], 4
      %s17 = int_to_ptr.vmem [resolvable:$true] %s16
      %22 = dma.hbm_to_vmem [thread:$0]  %s0, 4096, %s17, [#allocation3], 256, 256, 16
    $region5: #{tpu_custom_call.1} parent=1 // pred_fallthru
      _
    // Predicated region
    $region6: #{tpu_custom_call.1} parent=1 // pred_check
      _
    $region7: #{tpu_custom_call.1} parent=1 // pred_check_branch
      %24 = sbr.rel (0) target = $region9
    $region8: #{tpu_custom_call.1} parent=1 // pred_region
      %s26 = ssub.s32 32, 32
      %27 = vsyncadd [#allocation6], %s26
      %s29 = sshll.u32 [#allocation5], 4
      %s30 = int_to_ptr.vmem [resolvable:$true] %s29
      %32 = dma.hbm_to_vmem [thread:$0]  %s1, 32, %s30, [#allocation6]
    $region9: #{tpu_custom_call.1} parent=1 // pred_fallthru
      _
    // Predicated region
    $region10: #{tpu_custom_call.1} parent=1 // pred_check
      _
    $region11: #{tpu_custom_call.1} parent=1 // pred_check_branch
      %34 = sbr.rel (0) target = $region13
    $region12: #{tpu_custom_call.1} parent=1 // pred_region
      %s36 = ssub.s32 32, 32
      %37 = vsyncadd [#allocation6], %s36
      %s39 = sshll.u32 [#allocation7], 4
      %s40 = int_to_ptr.vmem [resolvable:$true] %s39
      %42 = dma.hbm_to_vmem [thread:$0]  %s2, 32, %s40, [#allocation6]
    $region13: #{tpu_custom_call.1} parent=1 // pred_fallthru
      _
    // Predicated region
    $region14: #{tpu_custom_call.1} parent=1 // pred_check
      _
    $region15: #{tpu_custom_call.1} parent=1 // pred_check_branch
      %44 = sbr.rel (0) target = $region17
    $region16: #{tpu_custom_call.1} parent=1 // pred_region
      %45 = dma.done [#allocation3], 4096
    $region17: #{tpu_custom_call.1} parent=1 // pred_fallthru
      _
    // Predicated region
    $region18: #{tpu_custom_call.1} parent=1 // pred_check
      _
    $region19: #{tpu_custom_call.1} parent=1 // pred_check_branch
      %47 = sbr.rel (0) target = $region21
    $region20: #{tpu_custom_call.1} parent=1 // pred_region
      %48 = dma.done [#allocation6], 32
    $region21: #{tpu_custom_call.1} parent=1 // pred_fallthru
      _
    // Predicated region
    $region22: #{tpu_custom_call.1} parent=1 // pred_check
      _
    $region23: #{tpu_custom_call.1} parent=1 // pred_check_branch
      %50 = sbr.rel (0) target = $region25
    $region24: #{tpu_custom_call.1} parent=1 // pred_region
      %51 = dma.done [#allocation6], 32
    $region25: #{tpu_custom_call.1} parent=1 // pred_fallthru
      _
    %v52 = vld [vmem:[#allocation2] sm:$0xff]
    %v53 = vld [vmem:[#allocation2 + $0x8] sm:$0xff]
    %v54 = vld [vmem:[#allocation2 + $0x10] sm:$0xff]
    %v55 = vld [vmem:[#allocation2 + $0x18] sm:$0xff]
    %v56 = vld [vmem:[#allocation2 + $0x20] sm:$0xff]
    %v57 = vld [vmem:[#allocation2 + $0x28] sm:$0xff]
    %v58 = vld [vmem:[#allocation2 + $0x30] sm:$0xff]
    %v59 = vld [vmem:[#allocation2 + $0x38] sm:$0xff]
    %v60 = vld [vmem:[#allocation2 + $0x40] sm:$0xff]
    %v61 = vld [vmem:[#allocation2 + $0x48] sm:$0xff]
    %v62 = vld [vmem:[#allocation2 + $0x50] sm:$0xff]
    %v63 = vld [vmem:[#allocation2 + $0x58] sm:$0xff]
    %v64 = vld [vmem:[#allocation2 + $0x60] sm:$0xff]
    %v65 = vld [vmem:[#allocation2 + $0x68] sm:$0xff]
    %v66 = vld [vmem:[#allocation2 + $0x70] sm:$0xff]
    %v67 = vld [vmem:[#allocation2 + $0x78] sm:$0xff]
    %v68 = vld [vmem:[#allocation2 + $0x80] sm:$0xff]
    %v69 = vld [vmem:[#allocation2 + $0x88] sm:$0xff]
    %v70 = vld [vmem:[#allocation2 + $0x90] sm:$0xff]
    %v71 = vld [vmem:[#allocation2 + $0x98] sm:$0xff]
    %v72 = vld [vmem:[#allocation2 + $0xa0] sm:$0xff]
    %v73 = vld [vmem:[#allocation2 + $0xa8] sm:$0xff]
    %v74 = vld [vmem:[#allocation2 + $0xb0] sm:$0xff]
    %v75 = vld [vmem:[#allocation2 + $0xb8] sm:$0xff]
    %v76 = vld [vmem:[#allocation2 + $0xc0] sm:$0xff]
    %v77 = vld [vmem:[#allocation2 + $0xc8] sm:$0xff]
    %v78 = vld [vmem:[#allocation2 + $0xd0] sm:$0xff]
    %v79 = vld [vmem:[#allocation2 + $0xd8] sm:$0xff]
    %v80 = vld [vmem:[#allocation2 + $0xe0] sm:$0xff]
    %v81 = vld [vmem:[#allocation2 + $0xe8] sm:$0xff]
    %v82 = vld [vmem:[#allocation2 + $0xf0] sm:$0xff]
    %v83 = vld [vmem:[#allocation2 + $0xf8] sm:$0xff]
    %v84 = vadd.f32 %v52, %v53
    %85 = vadd.xlane.f32.xlu0 %v84
    %v86 = vpop.xlane.xlu0 %85
    %v87 = vadd.f32 %v54, %v55
    %88 = vadd.xlane.f32.xlu0 %v87
    %v89 = vpop.xlane.xlu0 %88
    %v90 = vadd.f32 %v56, %v57
    %91 = vadd.xlane.f32.xlu0 %v90
    %v92 = vpop.xlane.xlu0 %91
    %v93 = vadd.f32 %v58, %v59
    %94 = vadd.xlane.f32.xlu0 %v93
    %v95 = vpop.xlane.xlu0 %94
    %v96 = vadd.f32 %v60, %v61
    %97 = vadd.xlane.f32.xlu0 %v96
    %v98 = vpop.xlane.xlu0 %97
    %v99 = vadd.f32 %v62, %v63
    %100 = vadd.xlane.f32.xlu0 %v99
    %v101 = vpop.xlane.xlu0 %100
    %v102 = vadd.f32 %v64, %v65
    %103 = vadd.xlane.f32.xlu0 %v102
    %v104 = vpop.xlane.xlu0 %103
    %v105 = vadd.f32 %v66, %v67
    %106 = vadd.xlane.f32.xlu0 %v105
    %v107 = vpop.xlane.xlu0 %106
    %v108 = vadd.f32 %v68, %v69
    %109 = vadd.xlane.f32.xlu0 %v108
    %v110 = vpop.xlane.xlu0 %109
    %v111 = vadd.f32 %v70, %v71
    %112 = vadd.xlane.f32.xlu0 %v111
    %v113 = vpop.xlane.xlu0 %112
    %v114 = vadd.f32 %v72, %v73
    %115 = vadd.xlane.f32.xlu0 %v114
    %v116 = vpop.xlane.xlu0 %115
    %v117 = vadd.f32 %v74, %v75
    %118 = vadd.xlane.f32.xlu0 %v117
    %v119 = vpop.xlane.xlu0 %118
    %v120 = vadd.f32 %v76, %v77
    %121 = vadd.xlane.f32.xlu0 %v120
    %v122 = vpop.xlane.xlu0 %121
    %v123 = vadd.f32 %v78, %v79
    %124 = vadd.xlane.f32.xlu0 %v123
    %v125 = vpop.xlane.xlu0 %124
    %v126 = vadd.f32 %v80, %v81
    %127 = vadd.xlane.f32.xlu0 %v126
    %v128 = vpop.xlane.xlu0 %127
    %v129 = vadd.f32 %v82, %v83
    %130 = vadd.xlane.f32.xlu0 %v129
    %v131 = vpop.xlane.xlu0 %130
    %v132 = vmul.f32 %v86, 0.00390625
    %v133 = vmul.f32 %v89, 0.00390625
    %v134 = vmul.f32 %v92, 0.00390625
    %v135 = vmul.f32 %v95, 0.00390625
    %v136 = vmul.f32 %v98, 0.00390625
    %v137 = vmul.f32 %v101, 0.00390625
    %v138 = vmul.f32 %v104, 0.00390625
    %v139 = vmul.f32 %v107, 0.00390625
    %v140 = vmul.f32 %v110, 0.00390625
    %v141 = vmul.f32 %v113, 0.00390625
    %v142 = vmul.f32 %v116, 0.00390625
    %v143 = vmul.f32 %v119, 0.00390625
    %v144 = vmul.f32 %v122, 0.00390625
    %v145 = vmul.f32 %v125, 0.00390625
    %v146 = vmul.f32 %v128, 0.00390625
    %v147 = vmul.f32 %v131, 0.00390625
    %v148 = vsub.f32 %v52, %v132
    %v149 = vsub.f32 %v53, %v132
    %v150 = vsub.f32 %v54, %v133
    %v151 = vsub.f32 %v55, %v133
    %v152 = vsub.f32 %v56, %v134
    %v153 = vsub.f32 %v57, %v134
    %v154 = vsub.f32 %v58, %v135
    %v155 = vsub.f32 %v59, %v135
    %v156 = vsub.f32 %v60, %v136
    %v157 = vsub.f32 %v61, %v136
    %v158 = vsub.f32 %v62, %v137
    %v159 = vsub.f32 %v63, %v137
    %v160 = vsub.f32 %v64, %v138
    %v161 = vsub.f32 %v65, %v138
    %v162 = vsub.f32 %v66, %v139
    %v163 = vsub.f32 %v67, %v139
    %v164 = vsub.f32 %v68, %v140
    %v165 = vsub.f32 %v69, %v140
    %v166 = vsub.f32 %v70, %v141
    %v167 = vsub.f32 %v71, %v141
    %v168 = vsub.f32 %v72, %v142
    %v169 = vsub.f32 %v73, %v142
    %v170 = vsub.f32 %v74, %v143
    %v171 = vsub.f32 %v75, %v143
    %v172 = vsub.f32 %v76, %v144
    %v173 = vsub.f32 %v77, %v144
    %v174 = vsub.f32 %v78, %v145
    %v175 = vsub.f32 %v79, %v145
    %v176 = vsub.f32 %v80, %v146
    %v177 = vsub.f32 %v81, %v146
    %v178 = vsub.f32 %v82, %v147
    %v179 = vsub.f32 %v83, %v147
    %v180 = vmul.f32 %v148, %v148
    %v181 = vmul.f32 %v149, %v149
    %v182 = vmul.f32 %v150, %v150
    %v183 = vmul.f32 %v151, %v151
    %v184 = vmul.f32 %v152, %v152
    %v185 = vmul.f32 %v153, %v153
    %v186 = vmul.f32 %v154, %v154
    %v187 = vmul.f32 %v155, %v155
    %v188 = vmul.f32 %v156, %v156
    %v189 = vmul.f32 %v157, %v157
    %v190 = vmul.f32 %v158, %v158
    %v191 = vmul.f32 %v159, %v159
    %v192 = vmul.f32 %v160, %v160
    %v193 = vmul.f32 %v161, %v161
    %v194 = vmul.f32 %v162, %v162
    %v195 = vmul.f32 %v163, %v163
    %v196 = vmul.f32 %v164, %v164
    %v197 = vmul.f32 %v165, %v165
    %v198 = vmul.f32 %v166, %v166
    %v199 = vmul.f32 %v167, %v167
    %v200 = vmul.f32 %v168, %v168
    %v201 = vmul.f32 %v169, %v169
    %v202 = vmul.f32 %v170, %v170
    %v203 = vmul.f32 %v171, %v171
    %v204 = vmul.f32 %v172, %v172
    %v205 = vmul.f32 %v173, %v173
    %v206 = vmul.f32 %v174, %v174
    %v207 = vmul.f32 %v175, %v175
    %v208 = vmul.f32 %v176, %v176
    %v209 = vmul.f32 %v177, %v177
    %v210 = vmul.f32 %v178, %v178
    %v211 = vmul.f32 %v179, %v179
    %v212 = vadd.f32 %v180, %v181
    %213 = vadd.xlane.f32.xlu0 %v212
    %v214 = vpop.xlane.xlu0 %213
    %v215 = vadd.f32 %v182, %v183
    %216 = vadd.xlane.f32.xlu0 %v215
    %v217 = vpop.xlane.xlu0 %216
    %v218 = vadd.f32 %v184, %v185
    %219 = vadd.xlane.f32.xlu0 %v218
    %v220 = vpop.xlane.xlu0 %219
    %v221 = vadd.f32 %v186, %v187
    %222 = vadd.xlane.f32.xlu0 %v221
    %v223 = vpop.xlane.xlu0 %222
    %v224 = vadd.f32 %v188, %v189
    %225 = vadd.xlane.f32.xlu0 %v224
    %v226 = vpop.xlane.xlu0 %225
    %v227 = vadd.f32 %v190, %v191
    %228 = vadd.xlane.f32.xlu0 %v227
    %v229 = vpop.xlane.xlu0 %228
    %v230 = vadd.f32 %v192, %v193
    %231 = vadd.xlane.f32.xlu0 %v230
    %v232 = vpop.xlane.xlu0 %231
    %v233 = vadd.f32 %v194, %v195
    %234 = vadd.xlane.f32.xlu0 %v233
    %v235 = vpop.xlane.xlu0 %234
    %v236 = vadd.f32 %v196, %v197
    %237 = vadd.xlane.f32.xlu0 %v236
    %v238 = vpop.xlane.xlu0 %237
    %v239 = vadd.f32 %v198, %v199
    %240 = vadd.xlane.f32.xlu0 %v239
    %v241 = vpop.xlane.xlu0 %240
    %v242 = vadd.f32 %v200, %v201
    %243 = vadd.xlane.f32.xlu0 %v242
    %v244 = vpop.xlane.xlu0 %243
    %v245 = vadd.f32 %v202, %v203
    %246 = vadd.xlane.f32.xlu0 %v245
    %v247 = vpop.xlane.xlu0 %246
    %v248 = vadd.f32 %v204, %v205
    %249 = vadd.xlane.f32.xlu0 %v248
    %v250 = vpop.xlane.xlu0 %249
    %v251 = vadd.f32 %v206, %v207
    %252 = vadd.xlane.f32.xlu0 %v251
    %v253 = vpop.xlane.xlu0 %252
    %v254 = vadd.f32 %v208, %v209
    %255 = vadd.xlane.f32.xlu0 %v254
    %v256 = vpop.xlane.xlu0 %255
    %v257 = vadd.f32 %v210, %v211
    %258 = vadd.xlane.f32.xlu0 %v257
    %v259 = vpop.xlane.xlu0 %258
    %v260 = vmul.f32 %v214, 0.00390625
    %v261 = vmul.f32 %v217, 0.00390625
    %v262 = vmul.f32 %v220, 0.00390625
    %v263 = vmul.f32 %v223, 0.00390625
    %v264 = vmul.f32 %v226, 0.00390625
    %v265 = vmul.f32 %v229, 0.00390625
    %v266 = vmul.f32 %v232, 0.00390625
    %v267 = vmul.f32 %v235, 0.00390625
    %v268 = vmul.f32 %v238, 0.00390625
    %v269 = vmul.f32 %v241, 0.00390625
    %v270 = vmul.f32 %v244, 0.00390625
    %v271 = vmul.f32 %v247, 0.00390625
    %v272 = vmul.f32 %v250, 0.00390625
    %v273 = vmul.f32 %v253, 0.00390625
    %v274 = vmul.f32 %v256, 0.00390625
    %v275 = vmul.f32 %v259, 0.00390625
    %v276 = vadd.f32 %v260, 1e-06
    %v277 = vadd.f32 %v261, 1e-06
    %v278 = vadd.f32 %v262, 1e-06
    %v279 = vadd.f32 %v263, 1e-06
    %v280 = vadd.f32 %v264, 1e-06
    %v281 = vadd.f32 %v265, 1e-06
    %v282 = vadd.f32 %v266, 1e-06
    %v283 = vadd.f32 %v267, 1e-06
    %v284 = vadd.f32 %v268, 1e-06
    %v285 = vadd.f32 %v269, 1e-06
    %v286 = vadd.f32 %v270, 1e-06
    %v287 = vadd.f32 %v271, 1e-06
    %v288 = vadd.f32 %v272, 1e-06
    %v289 = vadd.f32 %v273, 1e-06
    %v290 = vadd.f32 %v274, 1e-06
    %v291 = vadd.f32 %v275, 1e-06
    %v292 = vrsqrt.pop %v276
    %v293 = vrsqrt.pop %v277
    %v294 = vrsqrt.pop %v278
    %v295 = vrsqrt.pop %v279
    %v296 = vrsqrt.pop %v280
    %v297 = vrsqrt.pop %v281
    %v298 = vrsqrt.pop %v282
    %v299 = vrsqrt.pop %v283
    %v300 = vrsqrt.pop %v284
    %v301 = vrsqrt.pop %v285
    %v302 = vrsqrt.pop %v286
    %v303 = vrsqrt.pop %v287
    %v304 = vrsqrt.pop %v288
    %v305 = vrsqrt.pop %v289
    %v306 = vrsqrt.pop %v290
    %v307 = vrsqrt.pop %v291
    %v308 = vld [vmem:[#allocation5] sm:$0x3]
    %v309 = vld [vmem:[#allocation7] sm:$0x3]
    %v310 = vmul.f32 %v148, %v292
    %v311 = vmul.f32 %v149, %v292
    %v312 = vmul.f32 %v150, %v293
    %v313 = vmul.f32 %v151, %v293
    %v314 = vmul.f32 %v152, %v294
    %v315 = vmul.f32 %v153, %v294
    %v316 = vmul.f32 %v154, %v295
    %v317 = vmul.f32 %v155, %v295
    %v318 = vmul.f32 %v156, %v296
    %v319 = vmul.f32 %v157, %v296
    %v320 = vmul.f32 %v158, %v297
    %v321 = vmul.f32 %v159, %v297
    %v322 = vmul.f32 %v160, %v298
    %v323 = vmul.f32 %v161, %v298
    %v324 = vmul.f32 %v162, %v299
    %v325 = vmul.f32 %v163, %v299
    %v326 = vmul.f32 %v164, %v300
    %v327 = vmul.f32 %v165, %v300
    %v328 = vmul.f32 %v166, %v301
    %v329 = vmul.f32 %v167, %v301
    %v330 = vmul.f32 %v168, %v302
    %v331 = vmul.f32 %v169, %v302
    %v332 = vmul.f32 %v170, %v303
    %v333 = vmul.f32 %v171, %v303
    %v334 = vmul.f32 %v172, %v304
    %v335 = vmul.f32 %v173, %v304
    %v336 = vmul.f32 %v174, %v305
    %v337 = vmul.f32 %v175, %v305
    %v338 = vmul.f32 %v176, %v306
    %v339 = vmul.f32 %v177, %v306
    %v340 = vmul.f32 %v178, %v307
    %v341 = vmul.f32 %v179, %v307
    %v343 = vlaneseq
    %v344 = vshrl.u32 %v343, 7
    %v345 = vsub.s32 0, %v344
    %v346 = vrot.slane %v308, %v345
    %v347 = vlaneseq
    %v348 = vshrl.u32 %v347, 7
    %v349 = vsub.s32 1, %v348
    %v350 = vrot.slane %v308, %v349
    %v353 = vmul.f32 %v310, %v346
    %v354 = vmul.f32 %v311, %v350
    %v355 = vmul.f32 %v312, %v346
    %v356 = vmul.f32 %v313, %v350
    %v357 = vmul.f32 %v314, %v346
    %v358 = vmul.f32 %v315, %v350
    %v359 = vmul.f32 %v316, %v346
    %v360 = vmul.f32 %v317, %v350
    %v361 = vmul.f32 %v318, %v346
    %v362 = vmul.f32 %v319, %v350
    %v363 = vmul.f32 %v320, %v346
    %v364 = vmul.f32 %v321, %v350
    %v365 = vmul.f32 %v322, %v346
    %v366 = vmul.f32 %v323, %v350
    %v367 = vmul.f32 %v324, %v346
    %v368 = vmul.f32 %v325, %v350
    %v369 = vmul.f32 %v326, %v346
    %v370 = vmul.f32 %v327, %v350
    %v371 = vmul.f32 %v328, %v346
    %v372 = vmul.f32 %v329, %v350
    %v373 = vmul.f32 %v330, %v346
    %v374 = vmul.f32 %v331, %v350
    %v375 = vmul.f32 %v332, %v346
    %v376 = vmul.f32 %v333, %v350
    %v377 = vmul.f32 %v334, %v346
    %v378 = vmul.f32 %v335, %v350
    %v379 = vmul.f32 %v336, %v346
    %v380 = vmul.f32 %v337, %v350
    %v381 = vmul.f32 %v338, %v346
    %v382 = vmul.f32 %v339, %v350
    %v383 = vmul.f32 %v340, %v346
    %v384 = vmul.f32 %v341, %v350
    %v386 = vlaneseq
    %v387 = vshrl.u32 %v386, 7
    %v388 = vsub.s32 0, %v387
    %v389 = vrot.slane %v309, %v388
    %v390 = vlaneseq
    %v391 = vshrl.u32 %v390, 7
    %v392 = vsub.s32 1, %v391
    %v393 = vrot.slane %v309, %v392
    %v396 = vadd.f32 %v353, %v389
    %v397 = vadd.f32 %v354, %v393
    %v398 = vadd.f32 %v355, %v389
    %v399 = vadd.f32 %v356, %v393
    %v400 = vadd.f32 %v357, %v389
    %v401 = vadd.f32 %v358, %v393
    %v402 = vadd.f32 %v359, %v389
    %v403 = vadd.f32 %v360, %v393
    %v404 = vadd.f32 %v361, %v389
    %v405 = vadd.f32 %v362, %v393
    %v406 = vadd.f32 %v363, %v389
    %v407 = vadd.f32 %v364, %v393
    %v408 = vadd.f32 %v365, %v389
    %v409 = vadd.f32 %v366, %v393
    %v410 = vadd.f32 %v367, %v389
    %v411 = vadd.f32 %v368, %v393
    %v412 = vadd.f32 %v369, %v389
    %v413 = vadd.f32 %v370, %v393
    %v414 = vadd.f32 %v371, %v389
    %v415 = vadd.f32 %v372, %v393
    %v416 = vadd.f32 %v373, %v389
    %v417 = vadd.f32 %v374, %v393
    %v418 = vadd.f32 %v375, %v389
    %v419 = vadd.f32 %v376, %v393
    %v420 = vadd.f32 %v377, %v389
    %v421 = vadd.f32 %v378, %v393
    %v422 = vadd.f32 %v379, %v389
    %v423 = vadd.f32 %v380, %v393
    %v424 = vadd.f32 %v381, %v389
    %v425 = vadd.f32 %v382, %v393
    %v426 = vadd.f32 %v383, %v389
    %v427 = vadd.f32 %v384, %v393
    %428 = vst [vmem:[#allocation8] sm:$0xff] %v396
    %429 = vst [vmem:[#allocation8 + $0x8] sm:$0xff] %v397
    %430 = vst [vmem:[#allocation8 + $0x10] sm:$0xff] %v398
    %431 = vst [vmem:[#allocation8 + $0x18] sm:$0xff] %v399
    %432 = vst [vmem:[#allocation8 + $0x20] sm:$0xff] %v400
    %433 = vst [vmem:[#allocation8 + $0x28] sm:$0xff] %v401
    %434 = vst [vmem:[#allocation8 + $0x30] sm:$0xff] %v402
    %435 = vst [vmem:[#allocation8 + $0x38] sm:$0xff] %v403
    %436 = vst [vmem:[#allocation8 + $0x40] sm:$0xff] %v404
    %437 = vst [vmem:[#allocation8 + $0x48] sm:$0xff] %v405
    %438 = vst [vmem:[#allocation8 + $0x50] sm:$0xff] %v406
    %439 = vst [vmem:[#allocation8 + $0x58] sm:$0xff] %v407
    %440 = vst [vmem:[#allocation8 + $0x60] sm:$0xff] %v408
    %441 = vst [vmem:[#allocation8 + $0x68] sm:$0xff] %v409
    %442 = vst [vmem:[#allocation8 + $0x70] sm:$0xff] %v410
    %443 = vst [vmem:[#allocation8 + $0x78] sm:$0xff] %v411
    %444 = vst [vmem:[#allocation8 + $0x80] sm:$0xff] %v412
    %445 = vst [vmem:[#allocation8 + $0x88] sm:$0xff] %v413
    %446 = vst [vmem:[#allocation8 + $0x90] sm:$0xff] %v414
    %447 = vst [vmem:[#allocation8 + $0x98] sm:$0xff] %v415
    %448 = vst [vmem:[#allocation8 + $0xa0] sm:$0xff] %v416
    %449 = vst [vmem:[#allocation8 + $0xa8] sm:$0xff] %v417
    %450 = vst [vmem:[#allocation8 + $0xb0] sm:$0xff] %v418
    %451 = vst [vmem:[#allocation8 + $0xb8] sm:$0xff] %v419
    %452 = vst [vmem:[#allocation8 + $0xc0] sm:$0xff] %v420
    %453 = vst [vmem:[#allocation8 + $0xc8] sm:$0xff] %v421
    %454 = vst [vmem:[#allocation8 + $0xd0] sm:$0xff] %v422
    %455 = vst [vmem:[#allocation8 + $0xd8] sm:$0xff] %v423
    %456 = vst [vmem:[#allocation8 + $0xe0] sm:$0xff] %v424
    %457 = vst [vmem:[#allocation8 + $0xe8] sm:$0xff] %v425
    %458 = vst [vmem:[#allocation8 + $0xf0] sm:$0xff] %v426
    %459 = vst [vmem:[#allocation8 + $0xf8] sm:$0xff] %v427
    // Predicated region
    $region26: #{tpu_custom_call.1} parent=1 // pred_check
      _
    $region27: #{tpu_custom_call.1} parent=1 // pred_check_branch
      %461 = sbr.rel (0) target = $region29
    $region28: #{tpu_custom_call.1} parent=1 // pred_region
      %s463 = ssub.s32 4096, 4096
      %464 = vsyncadd [#allocation4], %s463
      %s465 = sshll.u32 [#allocation8], 4
      %s466 = int_to_ptr.vmem [resolvable:$true] %s465
      %471 = dma.vmem_to_hbm [thread:$0]  %s466, 4096, %s3, [#allocation4], 256, 256, 16
    $region29: #{tpu_custom_call.1} parent=1 // pred_fallthru
      _
    // Predicated region
    $region30: #{tpu_custom_call.1} parent=1 // pred_check
      _
    $region31: #{tpu_custom_call.1} parent=1 // pred_check_branch
      %473 = sbr.rel (0) target = $region33
    $region32: #{tpu_custom_call.1} parent=1 // pred_region
      %474 = dma.done [#allocation4], 4096
    $region33: #{tpu_custom_call.1} parent=1 // pred_fallthru
      _
    %475 = vsyncpa [#allocation3], 1
    %476 = vsyncpa [#allocation6], 1
    %477 = vsyncpa [#allocation4], 1

</llo_original>
